<compile_context>
chip_gen: v5e
topology: v5e:2x2
jax: 0.10.0
libtpu: 0.0.40
codegen_flags: <defaults>
</compile_context>

<pallas_src>
import jax
import jax.numpy as jnp
from jax.experimental import pallas as pl
from jax.experimental.pallas import tpu as pltpu


def _round_up(x: int, m: int) -> int:
    return ((x + m - 1) // m) * m


def _make_attention_kernel(seq_len, tile_s, tile_n, num_n, need_mask):
    n_sub = tile_s // 8  # number of 8-row vreg groups per seq tile

    def kernel(x_ref, w_ref, b_ref, o_ref, l_ref, acc_ref):
        # x_ref  : (tile_s, h_pad)  seq-row slab of hidden_states
        # w_ref  : (h_pad, tile_n)  W^T column slab (in, out layout) -- resident over seq
        # b_ref  : (1, tile_n)      bias slab
        # o_ref  : (1, tile_n)      context-vector slab (written on last seq step)
        # l_ref  : (8, tile_n) f32  sublane-partial softmax denominator
        # acc_ref: (8, tile_n) f32  sublane-partial weighted sum
        i = pl.program_id(1)                 # seq (reduction) axis -- innermost
        last = pl.num_programs(1) - 1

        @pl.when(i == 0)
        def _():
            l_ref[...] = jnp.zeros_like(l_ref)
            acc_ref[...] = jnp.zeros_like(acc_ref)

        # Linear: x @ W^T + b.  W is pre-transposed on the host, so this is a
        # plain (M,K)x(K,N) MXU contraction; HIGHEST keeps full f32 accuracy.
        logits = jnp.dot(x_ref[...], w_ref[...],
                         preferred_element_type=jnp.float32,
                         precision=jax.lax.Precision.HIGHEST)
        t = jnp.tanh(logits + b_ref[...].astype(jnp.float32))   # (tile_s, tile_n)

        # |t| <= 1  =>  exp(t) in [1/e, e]: plain running sums are numerically
        # safe; no running-max online softmax needed.
        e = jnp.exp(t)

        # Column slab of x for the weighted sum, taken from the row slab that is
        # already resident in VMEM for the matmul (no second HBM stream of x).
        if num_n == 1:
            x_col = x_ref[...]
        else:
            j = pl.program_id(0)
            x_col = x_ref[:, 0:tile_n]
            for jj in range(1, num_n):
                x_col = jnp.where(j == jj,
                                  x_ref[:, jj * tile_n:(jj + 1) * tile_n],
                                  x_col)
        x_col = x_col.astype(jnp.float32)

        def row_partial(v):
            # (tile_s, tile_n) -> (8, tile_n): tree of static vreg-row adds
            # (pure VPU); the final 8->1 XLU reduce is deferred to finalize.
            parts = [v[8 * k:8 * (k + 1), :] for k in range(n_sub)]
            while len(parts) > 1:
                parts = ([parts[a] + parts[a + 1]
                          for a in range(0, len(parts) - 1, 2)]
                         + ([parts[-1]] if len(parts) % 2 else []))
            return parts[0]

        def accumulate(ev):
            l_ref[...] += row_partial(ev)
            acc_ref[...] += row_partial(ev * x_col)

        if need_mask:
            # Only the last seq tile contains zero-padded rows.
            @pl.when(i < last)
            def _():
                accumulate(e)

            @pl.when(i == last)
            def _():
                row_ids = (jax.lax.broadcasted_iota(jnp.int32, (tile_s, 1), 0)
                           + i * tile_s)
                accumulate(jnp.where(row_ids < seq_len, e, 0.0))
        else:
            accumulate(e)

        @pl.when(i == last)
        def _():
            l_tot = jnp.sum(l_ref[...], axis=0, keepdims=True)     # (1, tile_n)
            acc_tot = jnp.sum(acc_ref[...], axis=0, keepdims=True)
            o_ref[...] = (acc_tot / l_tot).astype(o_ref.dtype)     # exact divide

    return kernel


def attention_forward(hidden_states, weight, bias):
    """hidden_states: (S, H); weight: (H, H) in nn.Linear (out, in) layout; bias: (H,)."""
    S, H = hidden_states.shape
    out_dtype = hidden_states.dtype
    itemsize = jnp.dtype(hidden_states.dtype).itemsize

    # dtype-aware sublane packing: 8 rows for 4-byte, 16 for 2-byte, 32 for 1-byte.
    sublane = {4: 8, 2: 16, 1: 32}.get(itemsize, 8)
    tile_s = min(256, _round_up(S, sublane))
    s_pad = _round_up(S, tile_s)

    # 128-wide column tiles when H fits in <= 256 lanes so the "parallel" grid
    # axis can split across both v7x TensorCores; 256-wide otherwise.
    h_min = _round_up(H, 128)
    tile_n = 128 if h_min <= 256 else 256
    h_pad = _round_up(H, tile_n)
    num_n = h_pad // tile_n
    num_s = s_pad // tile_s
    need_mask = s_pad != S

    # Zero-pad x; transpose + pad W to (in, out) layout.  In a real model the
    # W^T / bias padding would be done once at parameter-init time, not per call.
    x_p = hidden_states
    if (s_pad, h_pad) != (S, H):
        x_p = jnp.zeros((s_pad, h_pad), hidden_states.dtype).at[:S, :H].set(hidden_states)
    w_t = weight.T
    if h_pad != H:
        w_t = jnp.zeros((h_pad, h_pad), weight.dtype).at[:H, :H].set(w_t)
        b_p = jnp.zeros((1, h_pad), bias.dtype).at[0, :H].set(bias)
    else:
        b_p = bias.reshape(1, H)

    kernel = _make_attention_kernel(S, tile_s, tile_n, num_n, need_mask)

    # Explicit scoped-VMEM budget from the actual block footprint
    # (double-buffered inputs/output + f32 scratch), with headroom.
    block_bytes = (2 * (tile_s * h_pad + h_pad * tile_n + 2 * tile_n) * itemsize
                   + 2 * 8 * tile_n * 4)
    vmem_limit = int(min(64 * 2 ** 20, max(32 * 2 ** 20, 2 * block_bytes)))

    cost = pl.CostEstimate(
        flops=2 * s_pad * h_pad * h_pad + 8 * s_pad * h_pad,
        transcendentals=2 * s_pad * h_pad,                       # tanh + exp
        bytes_accessed=itemsize * (num_n * s_pad * h_pad         # x re-streamed per column tile
                                   + h_pad * h_pad               # weight (resident per tile)
                                   + 2 * h_pad),                 # bias + output
    )

    out = pl.pallas_call(
        kernel,
        out_shape=jax.ShapeDtypeStruct((1, h_pad), out_dtype),
        grid_spec=pltpu.PrefetchScalarGridSpec(
            num_scalar_prefetch=0,
            grid=(num_n, num_s),                                    # (out columns, seq); seq last
            in_specs=[
                pl.BlockSpec((tile_s, h_pad), lambda j, i: (i, 0)),   # x row slab
                pl.BlockSpec((h_pad, tile_n), lambda j, i: (0, j)),   # W^T column slab
                pl.BlockSpec((1, tile_n), lambda j, i: (0, j)),       # bias slab
            ],
            out_specs=pl.BlockSpec((1, tile_n), lambda j, i: (0, j)),
            scratch_shapes=[
                pltpu.VMEM((8, tile_n), jnp.float32),   # partial softmax denominator
                pltpu.VMEM((8, tile_n), jnp.float32),   # partial weighted sum
            ],
        ),
        compiler_params=pltpu.CompilerParams(
            dimension_semantics=("parallel", "arbitrary"),
            vmem_limit_bytes=vmem_limit),
        cost_estimate=cost,
    )(x_p, w_t, b_p)

    return out[0, :H]


def _reference(hidden_states, weight, bias):
    aw = jnp.tanh(jnp.dot(hidden_states, weight.T,
                          precision=jax.lax.Precision.HIGHEST) + bias)
    aw = jax.nn.softmax(aw, axis=0)
    return jnp.sum(aw * hidden_states, axis=0)


if __name__ == "__main__":
    key = jax.random.PRNGKey(0)

    # (8, 32): module-spec shape (single tile). (300, 320): multi-tile grid on both
    # the column ("parallel") and seq ("arbitrary") axes plus seq-row masking.
    for seq, hidden in [(8, 32), (300, 320)]:
        key, k1, k2, k3 = jax.random.split(key, 4)
        hidden_states = jax.random.normal(k1, (seq, hidden), dtype=jnp.float32)
        weight = jax.random.normal(k2, (hidden, hidden), dtype=jnp.float32) * 0.1
        bias = jax.random.normal(k3, (hidden,), dtype=jnp.float32) * 0.1

        out = attention_forward(hidden_states, weight, bias)
        jax.block_until_ready(out)

        ref = _reference(hidden_states, weight, bias)
        assert out.shape == (hidden,)
        err = float(jnp.max(jnp.abs(out - ref)))
        assert jnp.allclose(out, ref, atol=1e-3, rtol=1e-3), (seq, hidden, err)

    print("KERNEL_OK")
</pallas_src>

<mosaic_0001>
module attributes {stable_mosaic.version = 11 : i64} {
  func.func @kernel(%arg0: i32, %arg1: i32, %arg2: memref<8x128xf32, #tpu.memory_space<vmem>>, %arg3: memref<128x128xf32, #tpu.memory_space<vmem>>, %arg4: memref<1x128xf32, #tpu.memory_space<vmem>>, %arg5: memref<1x128xf32, #tpu.memory_space<vmem>>, %arg6: memref<8x128xf32, #tpu.memory_space<vmem>>, %arg7: memref<8x128xf32, #tpu.memory_space<vmem>>) attributes {dimension_semantics = [#tpu.dimension_semantics<parallel>, #tpu.dimension_semantics<arbitrary>], iteration_bounds = array<i64: 1, 1>, scalar_prefetch = 0 : i64, scratch_operands = 2 : i64, tpu.core_type = #tpu.core_type<tc>, window_params = [{transform_indices = @transform_0, window_bounds = array<i64: 8, 128>}, {transform_indices = @transform_1, window_bounds = array<i64: 128, 128>}, {transform_indices = @transform_2, window_bounds = array<i64: 1, 128>}, {transform_indices = @transform_3, window_bounds = array<i64: 1, 128>}]} {
    %c0_i32 = arith.constant 0 : i32
    %0 = arith.cmpi eq, %arg1, %c0_i32 : i32
    %1 = arith.extui %0 : i1 to i32
    %c0_i32_0 = arith.constant 0 : i32
    %2 = arith.cmpi ne, %1, %c0_i32_0 : i32
    scf.if %2 {
      %cst_18 = arith.constant 0.000000e+00 : f32
      %22 = vector.broadcast %cst_18 : f32 to vector<8x128xf32>
      %c0_19 = arith.constant 0 : index
      %c0_20 = arith.constant 0 : index
      %23 = vector.load %arg6[%c0_19, %c0_20] : memref<8x128xf32, #tpu.memory_space<vmem>>, vector<8x128xf32>
      tpu.vector_store %arg6[%c0_19, %c0_20], %22 {strides = array<i32>} : memref<8x128xf32, #tpu.memory_space<vmem>>, vector<8x128xf32>,
      %cst_21 = arith.constant 0.000000e+00 : f32
      %24 = vector.broadcast %cst_21 : f32 to vector<8x128xf32>
      %c0_22 = arith.constant 0 : index
      %c0_23 = arith.constant 0 : index
      %25 = vector.load %arg7[%c0_22, %c0_23] : memref<8x128xf32, #tpu.memory_space<vmem>>, vector<8x128xf32>
      tpu.vector_store %arg7[%c0_22, %c0_23], %24 {strides = array<i32>} : memref<8x128xf32, #tpu.memory_space<vmem>>, vector<8x128xf32>,
    } else {
    }
    %c0 = arith.constant 0 : index
    %c0_1 = arith.constant 0 : index
    %3 = vector.load %arg2[%c0, %c0_1] : memref<8x128xf32, #tpu.memory_space<vmem>>, vector<8x128xf32>
    %c0_2 = arith.constant 0 : index
    %c0_3 = arith.constant 0 : index
    %4 = vector.load %arg3[%c0_2, %c0_3] : memref<128x128xf32, #tpu.memory_space<vmem>>, vector<128x128xf32>
    %cst = arith.constant dense<0.000000e+00> : vector<8x128xf32>
    %5 = tpu.matmul %3, %4, %cst {dimension_numbers = #tpu.dot_dimension_numbers<[1], [0], [0], [1], [0, 0, 1, 1], [], []>, precision = #tpu.contract_precision<fp32>} : vector<8x128xf32>, vector<128x128xf32>, vector<8x128xf32> -> vector<8x128xf32>
    %c0_4 = arith.constant 0 : index
    %c0_5 = arith.constant 0 : index
    %6 = vector.load %arg4[%c0_4, %c0_5] : memref<1x128xf32, #tpu.memory_space<vmem>>, vector<1x128xf32>
    %7 = vector.broadcast %6 : vector<1x128xf32> to vector<8x128xf32>
    %8 = arith.addf %5, %7 : vector<8x128xf32>
    %9 = math.tanh %8 : vector<8x128xf32>
    %10 = math.exp %9 : vector<8x128xf32>
    %c0_6 = arith.constant 0 : index
    %c0_7 = arith.constant 0 : index
    %11 = vector.load %arg2[%c0_6, %c0_7] : memref<8x128xf32, #tpu.memory_space<vmem>>, vector<8x128xf32>
    %c0_8 = arith.constant 0 : index
    %c0_9 = arith.constant 0 : index
    %12 = vector.load %arg6[%c0_8, %c0_9] : memref<8x128xf32, #tpu.memory_space<vmem>>, vector<8x128xf32>
    %13 = arith.addf %12, %10 : vector<8x128xf32>
    %c0_10 = arith.constant 0 : index
    %c0_11 = arith.constant 0 : index
    %14 = vector.load %arg6[%c0_10, %c0_11] : memref<8x128xf32, #tpu.memory_space<vmem>>, vector<8x128xf32>
    tpu.vector_store %arg6[%c0_10, %c0_11], %13 {strides = array<i32>} : memref<8x128xf32, #tpu.memory_space<vmem>>, vector<8x128xf32>,
    %c0_12 = arith.constant 0 : index
    %c0_13 = arith.constant 0 : index
    %15 = vector.load %arg7[%c0_12, %c0_13] : memref<8x128xf32, #tpu.memory_space<vmem>>, vector<8x128xf32>
    %16 = arith.mulf %10, %11 : vector<8x128xf32>
    %17 = arith.addf %15, %16 : vector<8x128xf32>
    %c0_14 = arith.constant 0 : index
    %c0_15 = arith.constant 0 : index
    %18 = vector.load %arg7[%c0_14, %c0_15] : memref<8x128xf32, #tpu.memory_space<vmem>>, vector<8x128xf32>
    tpu.vector_store %arg7[%c0_14, %c0_15], %17 {strides = array<i32>} : memref<8x128xf32, #tpu.memory_space<vmem>>, vector<8x128xf32>,
    %c0_i32_16 = arith.constant 0 : i32
    %19 = arith.cmpi eq, %arg1, %c0_i32_16 : i32
    %20 = arith.extui %19 : i1 to i32
    %c0_i32_17 = arith.constant 0 : i32
    %21 = arith.cmpi ne, %20, %c0_i32_17 : i32
    scf.if %21 {
      %c0_18 = arith.constant 0 : index
      %c0_19 = arith.constant 0 : index
      %22 = vector.load %arg6[%c0_18, %c0_19] : memref<8x128xf32, #tpu.memory_space<vmem>>, vector<8x128xf32>
      %cst_20 = arith.constant dense<0.000000e+00> : vector<128xf32>
      %23 = vector.multi_reduction <add>, %22, %cst_20 [0] : vector<8x128xf32> to vector<128xf32>
      %24 = vector.shape_cast %23 : vector<128xf32> to vector<1x128xf32>
      %c0_21 = arith.constant 0 : index
      %c0_22 = arith.constant 0 : index
      %25 = vector.load %arg7[%c0_21, %c0_22] : memref<8x128xf32, #tpu.memory_space<vmem>>, vector<8x128xf32>
      %cst_23 = arith.constant dense<0.000000e+00> : vector<128xf32>
      %26 = vector.multi_reduction <add>, %25, %cst_23 [0] : vector<8x128xf32> to vector<128xf32>
      %27 = vector.shape_cast %26 : vector<128xf32> to vector<1x128xf32>
      %28 = arith.divf %27, %24 : vector<1x128xf32>
      %c0_24 = arith.constant 0 : index
      %c0_25 = arith.constant 0 : index
      %29 = vector.load %arg5[%c0_24, %c0_25] : memref<1x128xf32, #tpu.memory_space<vmem>>, vector<1x128xf32>
      tpu.vector_store %arg5[%c0_24, %c0_25], %28 {strides = array<i32>} : memref<1x128xf32, #tpu.memory_space<vmem>>, vector<1x128xf32>,
    } else {
    }
    return
  }
  func.func @transform_0(%arg0: i32, %arg1: i32) -> (i32, i32) {
    %c0_i32 = arith.constant 0 : i32
    %c0_i32_0 = arith.constant 0 : i32
    return %arg1, %c0_i32 : i32, i32
  }
  func.func @transform_1(%arg0: i32, %arg1: i32) -> (i32, i32) {
    %c0_i32 = arith.constant 0 : i32
    %c0_i32_0 = arith.constant 0 : i32
    return %c0_i32, %arg0 : i32, i32
  }
  func.func @transform_2(%arg0: i32, %arg1: i32) -> (i32, i32) {
    %c0_i32 = arith.constant 0 : i32
    %c0_i32_0 = arith.constant 0 : i32
    return %c0_i32, %arg0 : i32, i32
  }
  func.func @transform_3(%arg0: i32, %arg1: i32) -> (i32, i32) {
    %c0_i32 = arith.constant 0 : i32
    %c0_i32_0 = arith.constant 0 : i32
    return %c0_i32, %arg0 : i32, i32
  }
}

</mosaic_0001>

<llo_original>
// kernel: tpu_custom_call.1
$region0: #{tpu_custom_call.1}
  #allocation0 [shape = 'u32[]', space=smem, size = 0x4, offset = 0x4, fixed_abs, tag = 'smem constant byte address 0x4 - core index']
  #allocation1 [shape = 'u32[72,128]{1,0:T(1,128)}', space=vmem, size = 0x9000, scoped, tag = 'internal scratch']
  #allocation2 [shape = 'f32[8,128]{1,0:T(8,128)}', space=vmem, size = 0x1000, scoped, tag = 'scratch operand']
  #allocation3 [shape = 'f32[8,128]{1,0:T(8,128)}', space=vmem, size = 0x1000, scoped, tag = 'scratch operand']
  %s0 = inlined_call_operand.hbm [shape: f32[8,128], index: 0, kind: input, shape index: {}]
  %s1 = inlined_call_operand.hbm [shape: f32[128,128], index: 1, kind: input, shape index: {}]
  %s2 = inlined_call_operand.vmem [shape: f32[1,128], index: 2, kind: input, shape index: {}]
  %s3 = inlined_call_operand.hbm [shape: f32[1,128], index: 3, kind: output, shape index: {}]
  %s4 = sld [smem:[#allocation0]]
  $region38: #{tpu_custom_call.1} parent=0
    _
  %s6 = ssub.s32 1, %s4
  %s7 = scalar_select 0, %s6, %s4
  $region1: #{tpu_custom_call.1} parent=0
    #allocation4 [shape = 'u8[4096]{0}', space=vmem, size = 0x1000, scoped, tag = 'input window, operand 0, single buffered']
    #allocation5 [shape = 's32[1]{0}', space=sflag, size = 0x4, scoped, tag = 'scoped memory for tpu_custom_call.1']
    #allocation6 [shape = 's32[1]{0}', space=sflag, size = 0x4, scoped, tag = 'scoped memory for tpu_custom_call.1']
    #allocation7 [shape = 'u8[65536]{0}', space=vmem, size = 0x10000, scoped, tag = 'input window, operand 1, single buffered']
    #allocation8 [shape = 's32[1]{0}', space=sflag, size = 0x4, scoped, tag = 'scoped memory for tpu_custom_call.1']
    #allocation9 [shape = 'u8[512]{0}', space=vmem, size = 0x400, scoped, tag = 'output window, operand 0, single buffered']
    %8 = vsyncpa [#allocation5], 0
    %9 = vsyncpa [#allocation8], 0
    %10 = vsyncpa [#allocation6], 0
    // Predicated region
    $region2: #{tpu_custom_call.1} parent=1 // pred_check
      _
    $region3: #{tpu_custom_call.1} parent=1 // pred_check_branch
      %12 = sbr.rel (0) target = $region5
    $region4: #{tpu_custom_call.1} parent=1 // pred_region
      %14 = vsyncadd [#allocation5], 0
      %s16 = sshll.u32 %s0, 4
      %s17 = int_to_ptr.hbm [resolvable:$true] %s16
      %s18 = sshll.u32 [#allocation4], 4
      %s19 = int_to_ptr.vmem [resolvable:$true] %s18
      %21 = dma.hbm_to_vmem [thread:$0]  %s17, 128, %s19, [#allocation5]
    $region5: #{tpu_custom_call.1} parent=1 // pred_fallthru
      _
    // Predicated region
    $region6: #{tpu_custom_call.1} parent=1 // pred_check
      _
    $region7: #{tpu_custom_call.1} parent=1 // pred_check_branch
      %23 = sbr.rel (0) target = $region9
    $region8: #{tpu_custom_call.1} parent=1 // pred_region
      %25 = vsyncadd [#allocation8], 0
      %s26 = sshll.u32 %s1, 4
      %s27 = int_to_ptr.hbm [resolvable:$true] %s26
      %s28 = sshll.u32 [#allocation7], 4
      %s29 = int_to_ptr.vmem [resolvable:$true] %s28
      %34 = dma.hbm_to_vmem [thread:$0]  %s27, 2048, %s29, [#allocation8], 128, 128, 8
    $region9: #{tpu_custom_call.1} parent=1 // pred_fallthru
      _
    // Predicated region
    $region10: #{tpu_custom_call.1} parent=1 // pred_check
      _
    $region11: #{tpu_custom_call.1} parent=1 // pred_check_branch
      %36 = sbr.rel (0) target = $region13
    $region12: #{tpu_custom_call.1} parent=1 // pred_region
      _
    $region13: #{tpu_custom_call.1} parent=1 // pred_fallthru
      _
    // Predicated region
    $region14: #{tpu_custom_call.1} parent=1 // pred_check
      _
    $region15: #{tpu_custom_call.1} parent=1 // pred_check_branch
      %38 = sbr.rel (0) target = $region17
    $region16: #{tpu_custom_call.1} parent=1 // pred_region
      %40 = dma.done [#allocation5], 128
    $region17: #{tpu_custom_call.1} parent=1 // pred_fallthru
      _
    // Predicated region
    $region18: #{tpu_custom_call.1} parent=1 // pred_check
      _
    $region19: #{tpu_custom_call.1} parent=1 // pred_check_branch
      %42 = sbr.rel (0) target = $region21
    $region20: #{tpu_custom_call.1} parent=1 // pred_region
      %44 = dma.done [#allocation8], 2048
    $region21: #{tpu_custom_call.1} parent=1 // pred_fallthru
      _
    %p45 = scmp.eq.s32.totalorder 0, 0
    // Predicated region
    $region22: #{tpu_custom_call.1} parent=1 // pred_check
      %p46 = pneg %p45
    $region23: #{tpu_custom_call.1} parent=1 // pred_check_branch
      %48 = sbr.rel (%p46) target = $region25
    $region24: #{tpu_custom_call.1} parent=1 // pred_region
      %49 = vst [vmem:[#allocation2] sm:$0xff] 0.0
      %50 = vst [vmem:[#allocation3] sm:$0xff] 0.0
    $region25: #{tpu_custom_call.1} parent=1 // pred_fallthru
      _
    %v51 = vld [vmem:[#allocation4] sm:$0xff]
    %v52 = vld [vmem:[#allocation7] sm:$0xff]
    %v53 = vld [vmem:[#allocation7 + $0x8] sm:$0xff]
    %v54 = vld [vmem:[#allocation7 + $0x10] sm:$0xff]
    %v55 = vld [vmem:[#allocation7 + $0x18] sm:$0xff]
    %v56 = vld [vmem:[#allocation7 + $0x20] sm:$0xff]
    %v57 = vld [vmem:[#allocation7 + $0x28] sm:$0xff]
    %v58 = vld [vmem:[#allocation7 + $0x30] sm:$0xff]
    %v59 = vld [vmem:[#allocation7 + $0x38] sm:$0xff]
    %v60 = vld [vmem:[#allocation7 + $0x40] sm:$0xff]
    %v61 = vld [vmem:[#allocation7 + $0x48] sm:$0xff]
    %v62 = vld [vmem:[#allocation7 + $0x50] sm:$0xff]
    %v63 = vld [vmem:[#allocation7 + $0x58] sm:$0xff]
    %v64 = vld [vmem:[#allocation7 + $0x60] sm:$0xff]
    %v65 = vld [vmem:[#allocation7 + $0x68] sm:$0xff]
    %v66 = vld [vmem:[#allocation7 + $0x70] sm:$0xff]
    %v67 = vld [vmem:[#allocation7 + $0x78] sm:$0xff]
    %v68 = vld [vmem:[%s2] sm:$0x1]
    %v70 = vperm.slane %v68, 0
    %v72 = vand.u32 %v67, 4294901760
    %73 = vmatpush.msra.mxu0 %v72
    %v74 = vand.u32 %v66, 4294901760
    %75 = vmatpush.msra.mxu0 %v74
    %v76 = vand.u32 %v65, 4294901760
    %77 = vmatpush.msra.mxu0 %v76
    %v78 = vand.u32 %v64, 4294901760
    %79 = vmatpush.msra.mxu0 %v78
    %v80 = vand.u32 %v63, 4294901760
    %81 = vmatpush.msra.mxu0 %v80
    %v82 = vand.u32 %v62, 4294901760
    %83 = vmatpush.msra.mxu0 %v82
    %v84 = vand.u32 %v61, 4294901760
    %85 = vmatpush.msra.mxu0 %v84
    %v86 = vand.u32 %v60, 4294901760
    %87 = vmatpush.msra.mxu0 %v86
    %v88 = vand.u32 %v59, 4294901760
    %89 = vmatpush.msra.mxu0 %v88
    %v90 = vand.u32 %v58, 4294901760
    %91 = vmatpush.msra.mxu0 %v90
    %v92 = vand.u32 %v57, 4294901760
    %93 = vmatpush.msra.mxu0 %v92
    %v94 = vand.u32 %v56, 4294901760
    %95 = vmatpush.msra.mxu0 %v94
    %v96 = vand.u32 %v55, 4294901760
    %97 = vmatpush.msra.mxu0 %v96
    %v98 = vand.u32 %v54, 4294901760
    %99 = vmatpush.msra.mxu0 %v98
    %v100 = vand.u32 %v53, 4294901760
    %101 = vmatpush.msra.mxu0 %v100
    %v102 = vand.u32 %v52, 4294901760
    %103 = vmatpush.msra.mxu0 %v102
    %v104 = vand.u32 %v51, 4294901760
    %v105 = vsub.f32 %v51, %v104
    %v106 = vand.u32 %v105, 4294901760
    %v107 = vsub.f32 %v105, %v106
    %v108 = vand.u32 %v107, 4294901760
    %109 = vmatmul.f32.gmra.mxu0 %v108
    %v110 = vpop.f32.mrf.mxu0
    %v111 = vadd.f32 %v70, %v110
    %112 = vdwg.mxu0
    %v113 = vand.u32 %v67, 4294901760
    %v114 = vsub.f32 %v67, %v113
    %v115 = vand.u32 %v114, 4294901760
    %v116 = vsub.f32 %v114, %v115
    %v117 = vand.u32 %v116, 4294901760
    %118 = vmatpush.msra.mxu0 %v117
    %v119 = vand.u32 %v66, 4294901760
    %v120 = vsub.f32 %v66, %v119
    %v121 = vand.u32 %v120, 4294901760
    %v122 = vsub.f32 %v120, %v121
    %v123 = vand.u32 %v122, 4294901760
    %124 = vmatpush.msra.mxu0 %v123
    %v125 = vand.u32 %v65, 4294901760
    %v126 = vsub.f32 %v65, %v125
    %v127 = vand.u32 %v126, 4294901760
    %v128 = vsub.f32 %v126, %v127
    %v129 = vand.u32 %v128, 4294901760
    %130 = vmatpush.msra.mxu0 %v129
    %v131 = vand.u32 %v64, 4294901760
    %v132 = vsub.f32 %v64, %v131
    %v133 = vand.u32 %v132, 4294901760
    %v134 = vsub.f32 %v132, %v133
    %v135 = vand.u32 %v134, 4294901760
    %136 = vmatpush.msra.mxu0 %v135
    %v137 = vand.u32 %v63, 4294901760
    %v138 = vsub.f32 %v63, %v137
    %v139 = vand.u32 %v138, 4294901760
    %v140 = vsub.f32 %v138, %v139
    %v141 = vand.u32 %v140, 4294901760
    %142 = vmatpush.msra.mxu0 %v141
    %v143 = vand.u32 %v62, 4294901760
    %v144 = vsub.f32 %v62, %v143
    %v145 = vand.u32 %v144, 4294901760
    %v146 = vsub.f32 %v144, %v145
    %v147 = vand.u32 %v146, 4294901760
    %148 = vmatpush.msra.mxu0 %v147
    %v149 = vand.u32 %v61, 4294901760
    %v150 = vsub.f32 %v61, %v149
    %v151 = vand.u32 %v150, 4294901760
    %v152 = vsub.f32 %v150, %v151
    %v153 = vand.u32 %v152, 4294901760
    %154 = vmatpush.msra.mxu0 %v153
    %v155 = vand.u32 %v60, 4294901760
    %v156 = vsub.f32 %v60, %v155
    %v157 = vand.u32 %v156, 4294901760
    %v158 = vsub.f32 %v156, %v157
    %v159 = vand.u32 %v158, 4294901760
    %160 = vmatpush.msra.mxu0 %v159
    %v161 = vand.u32 %v59, 4294901760
    %v162 = vsub.f32 %v59, %v161
    %v163 = vand.u32 %v162, 4294901760
    %v164 = vsub.f32 %v162, %v163
    %v165 = vand.u32 %v164, 4294901760
    %166 = vmatpush.msra.mxu0 %v165
    %v167 = vand.u32 %v58, 4294901760
    %v168 = vsub.f32 %v58, %v167
    %v169 = vand.u32 %v168, 4294901760
    %v170 = vsub.f32 %v168, %v169
    %v171 = vand.u32 %v170, 4294901760
    %172 = vmatpush.msra.mxu0 %v171
    %v173 = vand.u32 %v57, 4294901760
    %v174 = vsub.f32 %v57, %v173
    %v175 = vand.u32 %v174, 4294901760
    %v176 = vsub.f32 %v174, %v175
    %v177 = vand.u32 %v176, 4294901760
    %178 = vmatpush.msra.mxu0 %v177
    %v179 = vand.u32 %v56, 4294901760
    %v180 = vsub.f32 %v56, %v179
    %v181 = vand.u32 %v180, 4294901760
    %v182 = vsub.f32 %v180, %v181
    %v183 = vand.u32 %v182, 4294901760
    %184 = vmatpush.msra.mxu0 %v183
    %v185 = vand.u32 %v55, 4294901760
    %v186 = vsub.f32 %v55, %v185
    %v187 = vand.u32 %v186, 4294901760
    %v188 = vsub.f32 %v186, %v187
    %v189 = vand.u32 %v188, 4294901760
    %190 = vmatpush.msra.mxu0 %v189
    %v191 = vand.u32 %v54, 4294901760
    %v192 = vsub.f32 %v54, %v191
    %v193 = vand.u32 %v192, 4294901760
    %v194 = vsub.f32 %v192, %v193
    %v195 = vand.u32 %v194, 4294901760
    %196 = vmatpush.msra.mxu0 %v195
    %v197 = vand.u32 %v53, 4294901760
    %v198 = vsub.f32 %v53, %v197
    %v199 = vand.u32 %v198, 4294901760
    %v200 = vsub.f32 %v198, %v199
    %v201 = vand.u32 %v200, 4294901760
    %202 = vmatpush.msra.mxu0 %v201
    %v203 = vand.u32 %v52, 4294901760
    %v204 = vsub.f32 %v52, %v203
    %v205 = vand.u32 %v204, 4294901760
    %v206 = vsub.f32 %v204, %v205
    %v207 = vand.u32 %v206, 4294901760
    %208 = vmatpush.msra.mxu0 %v207
    %v209 = vand.u32 %v51, 4294901760
    %210 = vmatmul.f32.gmra.mxu0 %v209
    %v211 = vpop.f32.mrf.mxu0
    %v212 = vadd.f32 %v111, %v211
    %213 = vdwg.mxu0
    %v214 = vand.u32 %v67, 4294901760
    %v215 = vsub.f32 %v67, %v214
    %216 = vmatpush.msra.mxu0 %v215
    %v217 = vand.u32 %v66, 4294901760
    %v218 = vsub.f32 %v66, %v217
    %219 = vmatpush.msra.mxu0 %v218
    %v220 = vand.u32 %v65, 4294901760
    %v221 = vsub.f32 %v65, %v220
    %222 = vmatpush.msra.mxu0 %v221
    %v223 = vand.u32 %v64, 4294901760
    %v224 = vsub.f32 %v64, %v223
    %225 = vmatpush.msra.mxu0 %v224
    %v226 = vand.u32 %v63, 4294901760
    %v227 = vsub.f32 %v63, %v226
    %228 = vmatpush.msra.mxu0 %v227
    %v229 = vand.u32 %v62, 4294901760
    %v230 = vsub.f32 %v62, %v229
    %231 = vmatpush.msra.mxu0 %v230
    %v232 = vand.u32 %v61, 4294901760
    %v233 = vsub.f32 %v61, %v232
    %234 = vmatpush.msra.mxu0 %v233
    %v235 = vand.u32 %v60, 4294901760
    %v236 = vsub.f32 %v60, %v235
    %237 = vmatpush.msra.mxu0 %v236
    %v238 = vand.u32 %v59, 4294901760
    %v239 = vsub.f32 %v59, %v238
    %240 = vmatpush.msra.mxu0 %v239
    %v241 = vand.u32 %v58, 4294901760
    %v242 = vsub.f32 %v58, %v241
    %243 = vmatpush.msra.mxu0 %v242
    %v244 = vand.u32 %v57, 4294901760
    %v245 = vsub.f32 %v57, %v244
    %246 = vmatpush.msra.mxu0 %v245
    %v247 = vand.u32 %v56, 4294901760
    %v248 = vsub.f32 %v56, %v247
    %249 = vmatpush.msra.mxu0 %v248
    %v250 = vand.u32 %v55, 4294901760
    %v251 = vsub.f32 %v55, %v250
    %252 = vmatpush.msra.mxu0 %v251
    %v253 = vand.u32 %v54, 4294901760
    %v254 = vsub.f32 %v54, %v253
    %255 = vmatpush.msra.mxu0 %v254
    %v256 = vand.u32 %v53, 4294901760
    %v257 = vsub.f32 %v53, %v256
    %258 = vmatpush.msra.mxu0 %v257
    %v259 = vand.u32 %v52, 4294901760
    %v260 = vsub.f32 %v52, %v259
    %261 = vmatpush.msra.mxu0 %v260
    %v262 = vand.u32 %v51, 4294901760
    %v263 = vsub.f32 %v51, %v262
    %264 = vmatmul.f32.gmra.mxu0 %v263
    %v265 = vpop.f32.mrf.mxu0
    %v266 = vadd.f32 %v212, %v265
    %267 = vdwg.mxu0
    %v268 = vand.u32 %v67, 4294901760
    %269 = vmatpush.msra.mxu0 %v268
    %v270 = vand.u32 %v66, 4294901760
    %271 = vmatpush.msra.mxu0 %v270
    %v272 = vand.u32 %v65, 4294901760
    %273 = vmatpush.msra.mxu0 %v272
    %v274 = vand.u32 %v64, 4294901760
    %275 = vmatpush.msra.mxu0 %v274
    %v276 = vand.u32 %v63, 4294901760
    %277 = vmatpush.msra.mxu0 %v276
    %v278 = vand.u32 %v62, 4294901760
    %279 = vmatpush.msra.mxu0 %v278
    %v280 = vand.u32 %v61, 4294901760
    %281 = vmatpush.msra.mxu0 %v280
    %v282 = vand.u32 %v60, 4294901760
    %283 = vmatpush.msra.mxu0 %v282
    %v284 = vand.u32 %v59, 4294901760
    %285 = vmatpush.msra.mxu0 %v284
    %v286 = vand.u32 %v58, 4294901760
    %287 = vmatpush.msra.mxu0 %v286
    %v288 = vand.u32 %v57, 4294901760
    %289 = vmatpush.msra.mxu0 %v288
    %v290 = vand.u32 %v56, 4294901760
    %291 = vmatpush.msra.mxu0 %v290
    %v292 = vand.u32 %v55, 4294901760
    %293 = vmatpush.msra.mxu0 %v292
    %v294 = vand.u32 %v54, 4294901760
    %295 = vmatpush.msra.mxu0 %v294
    %v296 = vand.u32 %v53, 4294901760
    %297 = vmatpush.msra.mxu0 %v296
    %v298 = vand.u32 %v52, 4294901760
    %299 = vmatpush.msra.mxu0 %v298
    %v300 = vand.u32 %v51, 4294901760
    %v301 = vsub.f32 %v51, %v300
    %v302 = vand.u32 %v301, 4294901760
    %303 = vmatmul.f32.gmra.mxu0 %v302
    %v304 = vpop.f32.mrf.mxu0
    %v305 = vadd.f32 %v266, %v304
    %306 = vdwg.mxu0
    %v307 = vand.u32 %v67, 4294901760
    %v308 = vsub.f32 %v67, %v307
    %v309 = vand.u32 %v308, 4294901760
    %310 = vmatpush.msra.mxu0 %v309
    %v311 = vand.u32 %v66, 4294901760
    %v312 = vsub.f32 %v66, %v311
    %v313 = vand.u32 %v312, 4294901760
    %314 = vmatpush.msra.mxu0 %v313
    %v315 = vand.u32 %v65, 4294901760
    %v316 = vsub.f32 %v65, %v315
    %v317 = vand.u32 %v316, 4294901760
    %318 = vmatpush.msra.mxu0 %v317
    %v319 = vand.u32 %v64, 4294901760
    %v320 = vsub.f32 %v64, %v319
    %v321 = vand.u32 %v320, 4294901760
    %322 = vmatpush.msra.mxu0 %v321
    %v323 = vand.u32 %v63, 4294901760
    %v324 = vsub.f32 %v63, %v323
    %v325 = vand.u32 %v324, 4294901760
    %326 = vmatpush.msra.mxu0 %v325
    %v327 = vand.u32 %v62, 4294901760
    %v328 = vsub.f32 %v62, %v327
    %v329 = vand.u32 %v328, 4294901760
    %330 = vmatpush.msra.mxu0 %v329
    %v331 = vand.u32 %v61, 4294901760
    %v332 = vsub.f32 %v61, %v331
    %v333 = vand.u32 %v332, 4294901760
    %334 = vmatpush.msra.mxu0 %v333
    %v335 = vand.u32 %v60, 4294901760
    %v336 = vsub.f32 %v60, %v335
    %v337 = vand.u32 %v336, 4294901760
    %338 = vmatpush.msra.mxu0 %v337
    %v339 = vand.u32 %v59, 4294901760
    %v340 = vsub.f32 %v59, %v339
    %v341 = vand.u32 %v340, 4294901760
    %342 = vmatpush.msra.mxu0 %v341
    %v343 = vand.u32 %v58, 4294901760
    %v344 = vsub.f32 %v58, %v343
    %v345 = vand.u32 %v344, 4294901760
    %346 = vmatpush.msra.mxu0 %v345
    %v347 = vand.u32 %v57, 4294901760
    %v348 = vsub.f32 %v57, %v347
    %v349 = vand.u32 %v348, 4294901760
    %350 = vmatpush.msra.mxu0 %v349
    %v351 = vand.u32 %v56, 4294901760
    %v352 = vsub.f32 %v56, %v351
    %v353 = vand.u32 %v352, 4294901760
    %354 = vmatpush.msra.mxu0 %v353
    %v355 = vand.u32 %v55, 4294901760
    %v356 = vsub.f32 %v55, %v355
    %v357 = vand.u32 %v356, 4294901760
    %358 = vmatpush.msra.mxu0 %v357
    %v359 = vand.u32 %v54, 4294901760
    %v360 = vsub.f32 %v54, %v359
    %v361 = vand.u32 %v360, 4294901760
    %362 = vmatpush.msra.mxu0 %v361
    %v363 = vand.u32 %v53, 4294901760
    %v364 = vsub.f32 %v53, %v363
    %v365 = vand.u32 %v364, 4294901760
    %366 = vmatpush.msra.mxu0 %v365
    %v367 = vand.u32 %v52, 4294901760
    %v368 = vsub.f32 %v52, %v367
    %v369 = vand.u32 %v368, 4294901760
    %370 = vmatpush.msra.mxu0 %v369
    %v371 = vand.u32 %v51, 4294901760
    %372 = vmatmul.f32.gmra.mxu0 %v371
    %v373 = vpop.f32.mrf.mxu0
    %v374 = vadd.f32 %v305, %v373
    %375 = vdwg.mxu0
    %v376 = vand.u32 %v67, 4294901760
    %377 = vmatpush.msra.mxu0 %v376
    %v378 = vand.u32 %v66, 4294901760
    %379 = vmatpush.msra.mxu0 %v378
    %v380 = vand.u32 %v65, 4294901760
    %381 = vmatpush.msra.mxu0 %v380
    %v382 = vand.u32 %v64, 4294901760
    %383 = vmatpush.msra.mxu0 %v382
    %v384 = vand.u32 %v63, 4294901760
    %385 = vmatpush.msra.mxu0 %v384
    %v386 = vand.u32 %v62, 4294901760
    %387 = vmatpush.msra.mxu0 %v386
    %v388 = vand.u32 %v61, 4294901760
    %389 = vmatpush.msra.mxu0 %v388
    %v390 = vand.u32 %v60, 4294901760
    %391 = vmatpush.msra.mxu0 %v390
    %v392 = vand.u32 %v59, 4294901760
    %393 = vmatpush.msra.mxu0 %v392
    %v394 = vand.u32 %v58, 4294901760
    %395 = vmatpush.msra.mxu0 %v394
    %v396 = vand.u32 %v57, 4294901760
    %397 = vmatpush.msra.mxu0 %v396
    %v398 = vand.u32 %v56, 4294901760
    %399 = vmatpush.msra.mxu0 %v398
    %v400 = vand.u32 %v55, 4294901760
    %401 = vmatpush.msra.mxu0 %v400
    %v402 = vand.u32 %v54, 4294901760
    %403 = vmatpush.msra.mxu0 %v402
    %v404 = vand.u32 %v53, 4294901760
    %405 = vmatpush.msra.mxu0 %v404
    %v406 = vand.u32 %v52, 4294901760
    %407 = vmatpush.msra.mxu0 %v406
    %v408 = vand.u32 %v51, 4294901760
    %409 = vmatmul.f32.gmra.mxu0 %v408
    %v410 = vpop.f32.mrf.mxu0
    %v411 = vadd.f32 %v374, %v410
    %412 = vdwg.mxu0
    %v413 = vtanh.pop %v411
    %v414 = vmul.f32 %v413, 1.442695
    %v415 = vpow.pop %v414
    %v416 = vld [vmem:[#allocation2] sm:$0xff]
    %v417 = vadd.f32 %v416, %v415
    %418 = vst [vmem:[#allocation2] sm:$0xff] %v417
    %v419 = vld [vmem:[#allocation3] sm:$0xff]
    %v420 = vmul.f32 %v415, %v51
    %v421 = vadd.f32 %v419, %v420
    %422 = vst [vmem:[#allocation3] sm:$0xff] %v421
    // Predicated region
    $region26: #{tpu_custom_call.1} parent=1 // pred_check
      %p423 = pneg %p45
    $region27: #{tpu_custom_call.1} parent=1 // pred_check_branch
      %425 = sbr.rel (%p423) target = $region29
    $region28: #{tpu_custom_call.1} parent=1 // pred_region
      %v426 = vld [vmem:[#allocation2] sm:$0xff]
      %v427 = vrot.slane %v426, 4
      %v428 = vadd.f32 %v426, %v427
      %v429 = vrot.slane %v428, 2
      %v430 = vadd.f32 %v428, %v429
      %v431 = vrot.slane %v430, 1
      %v432 = vadd.f32 %v430, %v431
      %v433 = vld [vmem:[#allocation3] sm:$0xff]
      %v434 = vrot.slane %v433, 4
      %v435 = vadd.f32 %v433, %v434
      %v436 = vrot.slane %v435, 2
      %v437 = vadd.f32 %v435, %v436
      %v438 = vrot.slane %v437, 1
      %v439 = vadd.f32 %v437, %v438
      %v440 = vrcp.pop %v432
      %v441 = vmul.f32 %v432, %v440
      %v442 = vsub.f32 1.0, %v441
      %v443 = vmul.f32 %v440, %v442
      %v444 = vadd.f32 %v440, %v443
      %vm445 = vweird.f32 %v432
      %vm446 = vweird.f32 %v440
      %vm447 = vmor %vm445, %vm446
      %v448 = vsel %vm447, %v440, %v444
      %v449 = vand.u32 2147483647, %v432
      %vm450 = vcmp.eq.f32.partialorder %v449, 8.507059e+37
      %v451 = vand.u32 %v432, 2147483648
      %v452 = vor.u32 1.1754944e-38, %v451
      %v453 = vsel %vm450, %v452, %v448
      %v454 = vmul.f32 %v439, %v453
      %455 = vst [vmem:[#allocation9] sm:$0x1] %v454
    $region29: #{tpu_custom_call.1} parent=1 // pred_fallthru
      _
    // Predicated region
    $region30: #{tpu_custom_call.1} parent=1 // pred_check
      _
    $region31: #{tpu_custom_call.1} parent=1 // pred_check_branch
      %457 = sbr.rel (0) target = $region33
    $region32: #{tpu_custom_call.1} parent=1 // pred_region
      %459 = vsyncadd [#allocation6], 0
      %s461 = sshll.u32 [#allocation9], 4
      %s462 = int_to_ptr.vmem [resolvable:$true] %s461
      %s463 = sshll.u32 %s3, 4
      %s464 = int_to_ptr.hbm [resolvable:$true] %s463
      %466 = dma.vmem_to_hbm [thread:$0]  %s462, 16, %s464, [#allocation6]
    $region33: #{tpu_custom_call.1} parent=1 // pred_fallthru
      _
    // Predicated region
    $region34: #{tpu_custom_call.1} parent=1 // pred_check
      _
    $region35: #{tpu_custom_call.1} parent=1 // pred_check_branch
      %468 = sbr.rel (0) target = $region37
    $region36: #{tpu_custom_call.1} parent=1 // pred_region
      %470 = dma.done [#allocation6], 16
    $region37: #{tpu_custom_call.1} parent=1 // pred_fallthru
      _
    %471 = vsyncpa [#allocation5], 1
    %472 = vsyncpa [#allocation8], 1
    %473 = vsyncpa [#allocation6], 1

</llo_original>
